<compile_context>
chip_gen: v7x
topology: tpu7x:2x2x1
jax: 0.10.0
libtpu: 0.0.40
codegen_flags: <defaults>
</compile_context>

<pallas_src>
import functools

import jax
import jax.numpy as jnp
from jax import lax
from jax.experimental import pallas as pl
from jax.experimental.pallas import tpu as pltpu


def _round_up(x, m):
    return (x + m - 1) // m * m


def _clamp_tile(requested, total_rows, row_bytes, budget_bytes):
    """Largest multiple-of-8 tile <= requested that fits the VMEM budget."""
    cap = max(8, (budget_bytes // max(row_bytes, 1)) // 8 * 8)
    t = min(requested, cap, _round_up(total_rows, 8))
    return max(8, (t // 8) * 8)


# ---------- Pass 1: Linear + bias + ReLU, write z and per-row stats ----------
def _linear_relu_stats_kernel(x_ref, wT_ref, b_ref, z_ref, rs_ref, rq_ref):
    # (tm, K) @ (K, N) on the MXU, accumulate in f32.
    z = jnp.dot(x_ref[...], wT_ref[...], preferred_element_type=jnp.float32)
    z = jnp.maximum(z + b_ref[...], 0.0)              # bias + ReLU
    z_ref[...] = z                                     # f32 intermediate
    # Streaming per-row stats (lane reduce; summed per channel in tiny glue).
    rs_ref[...] = jnp.sum(z, axis=1, keepdims=True)
    rq_ref[...] = jnp.sum(z * z, axis=1, keepdims=True)


# ---------- Pass 2: per-(b,c) scale/shift FMA on a lane-dense view ----------
def _scale_shift_kernel(z_ref, s_ref, t_ref, o_ref):
    # (tbc, H*N) * (tbc, 1) + (tbc, 1)  -> single FMA per element, dense store.
    o_ref[...] = (z_ref[...] * s_ref[...] + t_ref[...]).astype(o_ref.dtype)


@functools.partial(jax.jit, static_argnames=("eps", "block_rows", "block_bc"))
def fcn_layer(x, weight, bias, gamma, beta, eps=1e-5, block_rows=512, block_bc=256):
    B, C, H, K = x.shape
    N = weight.shape[0]
    assert C == N, "BatchNorm2d(channel_out) requires x.shape[1] == channel_out"

    out_dtype = x.dtype
    f32 = jnp.float32

    cparams = pltpu.CompilerParams(
        dimension_semantics=("parallel",),             # megacore-friendly
        vmem_limit_bytes=32 * 1024 * 1024,
    )

    # ---------------- Pass 1: row-tiled matmul + ReLU + row stats -----------
    M = B * C * H
    # Per-row VMEM (double-buffered in/out): x row (K) + z row (N) + 2 stats.
    p1_row_bytes = 4 * 2 * (K + N + 2)
    tm = _clamp_tile(block_rows, M, p1_row_bytes, 8 << 20)
    M_pad = _round_up(M, tm)

    x2 = x.reshape(M, K).astype(f32)                   # free contiguous reshape
    if M_pad != M:
        x2 = jnp.pad(x2, ((0, M_pad - M), (0, 0)))
    wT = weight.astype(f32).T                          # (K, N)
    b2 = bias.astype(f32).reshape(1, N)

    z, row_sum, row_sq = pl.pallas_call(
        _linear_relu_stats_kernel,
        out_shape=(
            jax.ShapeDtypeStruct((M_pad, N), f32),
            jax.ShapeDtypeStruct((M_pad, 1), f32),
            jax.ShapeDtypeStruct((M_pad, 1), f32),
        ),
        grid=(M_pad // tm,),
        in_specs=[
            pl.BlockSpec((tm, K), lambda i: (i, 0)),
            pl.BlockSpec((K, N), lambda i: (0, 0)),     # constant block: DMA'd once
            pl.BlockSpec((1, N), lambda i: (0, 0)),     # bias (vector math -> VMEM)
        ],
        out_specs=(
            pl.BlockSpec((tm, N), lambda i: (i, 0)),
            pl.BlockSpec((tm, 1), lambda i: (i, 0)),
            pl.BlockSpec((tm, 1), lambda i: (i, 0)),
        ),
        compiler_params=cparams,
    )(x2, wT, b2)

    # ---------------- Glue: tiny per-channel reduction + BN fold ------------
    # Rows are (b, c, h); BatchNorm reduces over (b, h, last-dim) per channel c.
    cnt = jnp.float32(B * H * N)
    ch_sum = row_sum[:M, 0].reshape(B, C, H).sum(axis=(0, 2))   # (C,)
    ch_sq = row_sq[:M, 0].reshape(B, C, H).sum(axis=(0, 2))     # (C,)
    mean = ch_sum / cnt
    var = ch_sq / cnt - mean * mean                  # biased var (PyTorch fwd)
    scale = gamma.astype(f32) * lax.rsqrt(var + eps)
    shift = beta.astype(f32) - scale * mean

    # ---------------- Pass 2: lane-dense normalize --------------------------
    BC = B * C
    HN = H * N
    out_bytes = jnp.dtype(out_dtype).itemsize
    # Per-slab VMEM (double-buffered): f32 z slab + out slab (+ tiny scale/shift).
    p2_row_bytes = 2 * HN * (4 + out_bytes) + 16
    tbc = _clamp_tile(block_bc, BC, p2_row_bytes, 8 << 20)
    BC_pad = _round_up(BC, tbc)

    z2 = z[:M].reshape(BC, HN)                        # free contiguous reshape
    bc_scale = jnp.tile(scale, B).reshape(BC, 1)      # scale[c] per (b, c) slab
    bc_shift = jnp.tile(shift, B).reshape(BC, 1)
    if BC_pad != BC:
        z2 = jnp.pad(z2, ((0, BC_pad - BC), (0, 0)))
        bc_scale = jnp.pad(bc_scale, ((0, BC_pad - BC), (0, 0)))
        bc_shift = jnp.pad(bc_shift, ((0, BC_pad - BC), (0, 0)))

    out2 = pl.pallas_call(
        _scale_shift_kernel,
        out_shape=jax.ShapeDtypeStruct((BC_pad, HN), out_dtype),
        grid=(BC_pad // tbc,),
        in_specs=[
            pl.BlockSpec((tbc, HN), lambda i: (i, 0)),
            pl.BlockSpec((tbc, 1), lambda i: (i, 0)),
            pl.BlockSpec((tbc, 1), lambda i: (i, 0)),
        ],
        out_specs=pl.BlockSpec((tbc, HN), lambda i: (i, 0)),
        compiler_params=cparams,
    )(z2, bc_scale, bc_shift)

    return out2[:BC].reshape(B, C, H, N)


def fcn_ref(x, weight, bias, gamma, beta, eps=1e-5):
    """Pure-JAX reference mirroring the PyTorch forward (training mode)."""
    z = jnp.einsum("bchk,nk->bchn", x, weight) + bias
    z = jnp.maximum(z, 0.0)
    m = jnp.mean(z, axis=(0, 2, 3), keepdims=True)
    v = jnp.mean((z - m) ** 2, axis=(0, 2, 3), keepdims=True)
    g = gamma.reshape(1, -1, 1, 1)
    b = beta.reshape(1, -1, 1, 1)
    return g * (z - m) * lax.rsqrt(v + eps) + b


if __name__ == "__main__":
    channel_in, channel_out = 16, 4
    B, C, H = 2, channel_out, 16        # C must equal channel_out; M = 128 rows

    key = jax.random.PRNGKey(0)
    kx, kw, kb, kg, kbe = jax.random.split(key, 5)

    x = jax.random.normal(kx, (B, C, H, channel_in), dtype=jnp.float32)

    # Deterministic parameter values (PyTorch-style bounds for Linear; nontrivial affine).
    bound = 1.0 / (channel_in ** 0.5)
    weight = jax.random.uniform(kw, (channel_out, channel_in), jnp.float32, -bound, bound)
    bias = jax.random.uniform(kb, (channel_out,), jnp.float32, -bound, bound)
    gamma = jax.random.uniform(kg, (channel_out,), jnp.float32, 0.5, 1.5)
    beta = 0.1 * jax.random.normal(kbe, (channel_out,), jnp.float32)

    out = fcn_layer(x, weight, bias, gamma, beta, eps=1e-5)
    out = jax.block_until_ready(out)

    ref = fcn_ref(x, weight, bias, gamma, beta, eps=1e-5)
    assert out.shape == (B, C, H, channel_out)
    assert jnp.allclose(out, ref, atol=1e-4, rtol=1e-4), "mismatch vs reference"

    print("KERNEL_OK")
</pallas_src>

<mosaic_0001>
module attributes {stable_mosaic.version = 11 : i64} {
  func.func @_linear_relu_stats_kernel(%arg0: i32, %arg1: memref<128x16xf32, #tpu.memory_space<vmem>>, %arg2: memref<16x4xf32, #tpu.memory_space<vmem>>, %arg3: memref<1x4xf32, #tpu.memory_space<vmem>>, %arg4: memref<128x4xf32, #tpu.memory_space<vmem>>, %arg5: memref<128x1xf32, #tpu.memory_space<vmem>>, %arg6: memref<128x1xf32, #tpu.memory_space<vmem>>) attributes {dimension_semantics = [#tpu.dimension_semantics<parallel>], iteration_bounds = array<i64: 1>, scalar_prefetch = 0 : i64, scratch_operands = 0 : i64, tpu.core_type = #tpu.core_type<tc>, window_params = [{transform_indices = @transform_0, window_bounds = array<i64: 128, 16>}, {pipeline_mode = #tpu.pipeline_mode<synchronous>, transform_indices = @transform_1, window_bounds = array<i64: 16, 4>}, {pipeline_mode = #tpu.pipeline_mode<synchronous>, transform_indices = @transform_2, window_bounds = array<i64: 1, 4>}, {transform_indices = @transform_3, window_bounds = array<i64: 128, 4>}, {transform_indices = @transform_4, window_bounds = array<i64: 128, 1>}, {transform_indices = @transform_5, window_bounds = array<i64: 128, 1>}]} {
    %c0 = arith.constant 0 : index
    %c0_0 = arith.constant 0 : index
    %0 = vector.load %arg1[%c0, %c0_0] : memref<128x16xf32, #tpu.memory_space<vmem>>, vector<128x16xf32>
    %c0_1 = arith.constant 0 : index
    %c0_2 = arith.constant 0 : index
    %1 = vector.load %arg2[%c0_1, %c0_2] : memref<16x4xf32, #tpu.memory_space<vmem>>, vector<16x4xf32>
    %cst = arith.constant dense<0.000000e+00> : vector<128x4xf32>
    %2 = tpu.matmul %0, %1, %cst {dimension_numbers = #tpu.dot_dimension_numbers<[1], [0], [0], [1], [0, 0, 1, 1], [], []>} : vector<128x16xf32>, vector<16x4xf32>, vector<128x4xf32> -> vector<128x4xf32>
    %c0_3 = arith.constant 0 : index
    %c0_4 = arith.constant 0 : index
    %3 = vector.load %arg3[%c0_3, %c0_4] : memref<1x4xf32, #tpu.memory_space<vmem>>, vector<1x4xf32>
    %4 = vector.broadcast %3 : vector<1x4xf32> to vector<128x4xf32>
    %5 = arith.addf %2, %4 : vector<128x4xf32>
    %cst_5 = arith.constant 0.000000e+00 : f32
    %6 = vector.broadcast %cst_5 : f32 to vector<128x4xf32>
    %7 = arith.maximumf %5, %6 : vector<128x4xf32>
    %c0_6 = arith.constant 0 : index
    %c0_7 = arith.constant 0 : index
    %8 = vector.load %arg4[%c0_6, %c0_7] : memref<128x4xf32, #tpu.memory_space<vmem>>, vector<128x4xf32>
    tpu.vector_store %arg4[%c0_6, %c0_7], %7 {strides = array<i32>} : memref<128x4xf32, #tpu.memory_space<vmem>>, vector<128x4xf32>,
    %cst_8 = arith.constant dense<0.000000e+00> : vector<128xf32>
    %9 = vector.multi_reduction <add>, %7, %cst_8 [1] : vector<128x4xf32> to vector<128xf32>
    %10 = vector.shape_cast %9 : vector<128xf32> to vector<128x1xf32>
    %c0_9 = arith.constant 0 : index
    %c0_10 = arith.constant 0 : index
    %11 = vector.load %arg5[%c0_9, %c0_10] : memref<128x1xf32, #tpu.memory_space<vmem>>, vector<128x1xf32>
    tpu.vector_store %arg5[%c0_9, %c0_10], %10 {strides = array<i32>} : memref<128x1xf32, #tpu.memory_space<vmem>>, vector<128x1xf32>,
    %12 = arith.mulf %7, %7 : vector<128x4xf32>
    %cst_11 = arith.constant dense<0.000000e+00> : vector<128xf32>
    %13 = vector.multi_reduction <add>, %12, %cst_11 [1] : vector<128x4xf32> to vector<128xf32>
    %14 = vector.shape_cast %13 : vector<128xf32> to vector<128x1xf32>
    %c0_12 = arith.constant 0 : index
    %c0_13 = arith.constant 0 : index
    %15 = vector.load %arg6[%c0_12, %c0_13] : memref<128x1xf32, #tpu.memory_space<vmem>>, vector<128x1xf32>
    tpu.vector_store %arg6[%c0_12, %c0_13], %14 {strides = array<i32>} : memref<128x1xf32, #tpu.memory_space<vmem>>, vector<128x1xf32>,
    return
  }
  func.func @transform_0(%arg0: i32) -> (i32, i32) {
    %c0_i32 = arith.constant 0 : i32
    %c0_i32_0 = arith.constant 0 : i32
    return %arg0, %c0_i32 : i32, i32
  }
  func.func @transform_1(%arg0: i32) -> (i32, i32) {
    %c0_i32 = arith.constant 0 : i32
    %c0_i32_0 = arith.constant 0 : i32
    %c0_i32_1 = arith.constant 0 : i32
    return %c0_i32, %c0_i32_0 : i32, i32
  }
  func.func @transform_2(%arg0: i32) -> (i32, i32) {
    %c0_i32 = arith.constant 0 : i32
    %c0_i32_0 = arith.constant 0 : i32
    %c0_i32_1 = arith.constant 0 : i32
    return %c0_i32, %c0_i32_0 : i32, i32
  }
  func.func @transform_3(%arg0: i32) -> (i32, i32) {
    %c0_i32 = arith.constant 0 : i32
    %c0_i32_0 = arith.constant 0 : i32
    return %arg0, %c0_i32 : i32, i32
  }
  func.func @transform_4(%arg0: i32) -> (i32, i32) {
    %c0_i32 = arith.constant 0 : i32
    %c0_i32_0 = arith.constant 0 : i32
    return %arg0, %c0_i32 : i32, i32
  }
  func.func @transform_5(%arg0: i32) -> (i32, i32) {
    %c0_i32 = arith.constant 0 : i32
    %c0_i32_0 = arith.constant 0 : i32
    return %arg0, %c0_i32 : i32, i32
  }
}

module attributes {stable_mosaic.version = 11 : i64} {
  func.func @_scale_shift_kernel(%arg0: i32, %arg1: memref<8x64xf32, #tpu.memory_space<vmem>>, %arg2: memref<8x1xf32, #tpu.memory_space<vmem>>, %arg3: memref<8x1xf32, #tpu.memory_space<vmem>>, %arg4: memref<8x64xf32, #tpu.memory_space<vmem>>) attributes {dimension_semantics = [#tpu.dimension_semantics<parallel>], iteration_bounds = array<i64: 1>, scalar_prefetch = 0 : i64, scratch_operands = 0 : i64, tpu.core_type = #tpu.core_type<tc>, window_params = [{transform_indices = @transform_0, window_bounds = array<i64: 8, 64>}, {transform_indices = @transform_1, window_bounds = array<i64: 8, 1>}, {transform_indices = @transform_2, window_bounds = array<i64: 8, 1>}, {transform_indices = @transform_3, window_bounds = array<i64: 8, 64>}]} {
    %c0 = arith.constant 0 : index
    %c0_0 = arith.constant 0 : index
    %0 = vector.load %arg1[%c0, %c0_0] : memref<8x64xf32, #tpu.memory_space<vmem>>, vector<8x64xf32>
    %c0_1 = arith.constant 0 : index
    %c0_2 = arith.constant 0 : index
    %1 = vector.load %arg2[%c0_1, %c0_2] : memref<8x1xf32, #tpu.memory_space<vmem>>, vector<8x1xf32>
    %2 = vector.broadcast %1 : vector<8x1xf32> to vector<8x64xf32>
    %3 = arith.mulf %0, %2 : vector<8x64xf32>
    %c0_3 = arith.constant 0 : index
    %c0_4 = arith.constant 0 : index
    %4 = vector.load %arg3[%c0_3, %c0_4] : memref<8x1xf32, #tpu.memory_space<vmem>>, vector<8x1xf32>
    %5 = vector.broadcast %4 : vector<8x1xf32> to vector<8x64xf32>
    %6 = arith.addf %3, %5 : vector<8x64xf32>
    %c0_5 = arith.constant 0 : index
    %c0_6 = arith.constant 0 : index
    %7 = vector.load %arg4[%c0_5, %c0_6] : memref<8x64xf32, #tpu.memory_space<vmem>>, vector<8x64xf32>
    tpu.vector_store %arg4[%c0_5, %c0_6], %6 {strides = array<i32>} : memref<8x64xf32, #tpu.memory_space<vmem>>, vector<8x64xf32>,
    return
  }
  func.func @transform_0(%arg0: i32) -> (i32, i32) {
    %c0_i32 = arith.constant 0 : i32
    %c0_i32_0 = arith.constant 0 : i32
    return %arg0, %c0_i32 : i32, i32
  }
  func.func @transform_1(%arg0: i32) -> (i32, i32) {
    %c0_i32 = arith.constant 0 : i32
    %c0_i32_0 = arith.constant 0 : i32
    return %arg0, %c0_i32 : i32, i32
  }
  func.func @transform_2(%arg0: i32) -> (i32, i32) {
    %c0_i32 = arith.constant 0 : i32
    %c0_i32_0 = arith.constant 0 : i32
    return %arg0, %c0_i32 : i32, i32
  }
  func.func @transform_3(%arg0: i32) -> (i32, i32) {
    %c0_i32 = arith.constant 0 : i32
    %c0_i32_0 = arith.constant 0 : i32
    return %arg0, %c0_i32 : i32, i32
  }
}

</mosaic_0001>

<llo_original>
// kernel: squeeze.2
$region0: #{squeeze.2}
  %s0 = inlined_call_operand.vmem [shape: f32[128], index: 0, kind: input, shape index: {}]
  %s1 = inlined_call_operand.vmem [shape: f32[2,4,16], index: 1, kind: output, shape index: {}]
  $region1: #{squeeze.2} parent=0
    #allocation0 [shape = 'u8[8192]{0}', space=vmem, size = 0x2000, scoped, tag = 'scoped mem for output reshape']
    #allocation1 [shape = 'u8[4096]{0}', space=vmem, size = 0x1000, scoped, tag = 'scoped mem for input reshape']
    %s3 = sshllo.u32 0, 1
    %v4 = vld [vmem:[%s0] sm:%s3]
    %5 = vst [vmem:[#allocation1] sm:%s3] %v4
    %v6 = vld [vmem:[#allocation1] sm:$0x1]
    %vm7 = vcmask 130048
    %8 = vst.msk [vmem:[#allocation0] sm:$0x1] %vm7, %v6
    %v9 = vld [vmem:[#allocation1] sm:$0x1]
    %10 = vrot.lane.b32.xlu0 %v9, 112
    %v11 = vpop.permute.xlu0 %10
    %vm12 = vcmask 130048
    %s13 = scalar_lea.vmem [#allocation0], 1
    %14 = vst.msk [vmem:[%s13] sm:$0x1] %vm12, %v11
    %v15 = vld [vmem:[#allocation1] sm:$0x1]
    %16 = vrot.lane.b32.xlu0 %v15, 96
    %v17 = vpop.permute.xlu0 %16
    %vm18 = vcmask 130048
    %s19 = scalar_lea.vmem [#allocation0], 2
    %20 = vst.msk [vmem:[%s19] sm:$0x1] %vm18, %v17
    %v21 = vld [vmem:[#allocation1] sm:$0x1]
    %22 = vrot.lane.b32.xlu0 %v21, 80
    %v23 = vpop.permute.xlu0 %22
    %vm24 = vcmask 130048
    %s25 = scalar_lea.vmem [#allocation0], 3
    %26 = vst.msk [vmem:[%s25] sm:$0x1] %vm24, %v23
    %v27 = vld [vmem:[#allocation1] sm:$0x1]
    %28 = vrot.lane.b32.xlu0 %v27, 64
    %v29 = vpop.permute.xlu0 %28
    %vm30 = vcmask 130048
    %s31 = scalar_lea.vmem [#allocation0], 8
    %32 = vst.msk [vmem:[%s31] sm:$0x1] %vm30, %v29
    %v33 = vld [vmem:[#allocation1] sm:$0x1]
    %34 = vrot.lane.b32.xlu0 %v33, 48
    %v35 = vpop.permute.xlu0 %34
    %vm36 = vcmask 130048
    %s37 = scalar_lea.vmem [#allocation0], 9
    %38 = vst.msk [vmem:[%s37] sm:$0x1] %vm36, %v35
    %v39 = vld [vmem:[#allocation1] sm:$0x1]
    %40 = vrot.lane.b32.xlu0 %v39, 32
    %v41 = vpop.permute.xlu0 %40
    %vm42 = vcmask 130048
    %s43 = scalar_lea.vmem [#allocation0], 10
    %44 = vst.msk [vmem:[%s43] sm:$0x1] %vm42, %v41
    %v45 = vld [vmem:[#allocation1] sm:$0x1]
    %46 = vrot.lane.b32.xlu0 %v45, 16
    %v47 = vpop.permute.xlu0 %46
    %vm48 = vcmask 130048
    %s49 = scalar_lea.vmem [#allocation0], 11
    %50 = vst.msk [vmem:[%s49] sm:$0x1] %vm48, %v47
    %s52 = sshllo.u32 0, 4
    %v54 = vld [vmem:[#allocation0] sm:%s52]
    %s55 = sshllo.u32 0, 4
    %56 = vst [vmem:[%s1] sm:%s55] %v54
    %s57 = scalar_lea.vmem [#allocation0], 8
    %v58 = vld [vmem:[%s57] sm:%s52]
    %s59 = sshllo.u32 0, 4
    %s60 = scalar_lea.vmem %s1, 4
    %61 = vst [vmem:[%s60] sm:%s59] %v58

// kernel: tile.18
$region0: #{tile.18}
  #allocation0 [shape = 's32[1]{0}', space=sflag, size = 0x4, scoped, tag = 'scoped memory for tile.18']
  %s0 = inlined_call_operand.vmem [shape: f32[4], index: 0, kind: input, shape index: {}]
  %s1 = inlined_call_operand.vmem [shape: f32[2,4], index: 1, kind: output, shape index: {}]
  // Predicated region
  $region2: #{tile.18} parent=0 // pred_check
    _
  $region3: #{tile.18} parent=0 // pred_check_branch
    %3 = sbr.rel (0) target = $region5
  $region4: #{tile.18} parent=0 // pred_region
    _
  $region5: #{tile.18} parent=0 // pred_fallthru
    _
  %v4 = vld [vmem:[%s0] ss:$0 sm:$0xff]
  %5 = vst [vmem:[%s1] sm:$0x3] %v4

// kernel: tile.0
$region0: #{tile.0}
  %s0 = inlined_call_operand.vmem [shape: f32[2,4], index: 0, kind: input, shape index: {}]
  %s1 = inlined_call_operand.vmem [shape: f32[8,1], index: 1, kind: output, shape index: {}]
  $region1: #{tile.0} parent=0
    #allocation0 [shape = 'u8[4096]{0}', space=vmem, size = 0x1000, scoped, tag = 'scoped mem for input reshape']
    %s3 = sshllo.u32 0, 2
    %v4 = vld [vmem:[%s0] sm:%s3]
    %5 = vst [vmem:[#allocation0] sm:%s3] %v4
    %v6 = vld [vmem:[#allocation0] sm:$0x3]
    %vm7 = vcmask 7168
    %8 = vst.msk [vmem:[%s1] ss:$4 sm:$0x3] %vm7, %v6
    %v9 = vld [vmem:[#allocation0] sm:$0x3]
    %10 = vrot.lane.b32.xlu0 %v9, 127
    %v11 = vpop.permute.xlu0 %10
    %vm12 = vcmask 7168
    %s13 = scalar_lea.vmem %s1, 1
    %14 = vst.msk [vmem:[%s13] ss:$4 sm:$0x3] %vm12, %v11
    %v15 = vld [vmem:[#allocation0] sm:$0x3]
    %16 = vrot.lane.b32.xlu0 %v15, 126
    %v17 = vpop.permute.xlu0 %16
    %vm18 = vcmask 7168
    %s19 = scalar_lea.vmem %s1, 2
    %20 = vst.msk [vmem:[%s19] ss:$4 sm:$0x3] %vm18, %v17
    %v21 = vld [vmem:[#allocation0] sm:$0x3]
    %22 = vrot.lane.b32.xlu0 %v21, 125
    %v23 = vpop.permute.xlu0 %22
    %vm24 = vcmask 7168
    %s25 = scalar_lea.vmem %s1, 3
    %26 = vst.msk [vmem:[%s25] ss:$4 sm:$0x3] %vm24, %v23

// kernel: fcn_layer.2
$region0: #{fcn_layer.2}
  #allocation0 [shape = 'u32[]', space=smem, size = 0x4, offset = 0x4, fixed_abs, tag = 'smem constant byte address 0x4 - core index']
  #allocation1 [shape = 'u32[144,128]{1,0:T(1,128)}', space=vmem, size = 0x12000, scoped, tag = 'internal scratch']
  %s0 = inlined_call_operand.hbm [shape: f32[128,16], index: 0, kind: input, shape index: {}]
  %s1 = inlined_call_operand.vmem [shape: f32[16,4], index: 1, kind: input, shape index: {}]
  %s2 = inlined_call_operand.vmem [shape: f32[1,4], index: 2, kind: input, shape index: {}]
  %s3 = inlined_call_operand.vmem [shape: f32[128,4], index: 3, kind: output, shape index: {0}]
  %s4 = inlined_call_operand.vmem [shape: f32[128,1], index: 4, kind: output, shape index: {1}]
  %s5 = inlined_call_operand.vmem [shape: f32[128,1], index: 5, kind: output, shape index: {2}]
  %6 = xla_tuple %s3, %s4, %s5
  %s7 = sld [smem:[#allocation0]]
  $region42: #{fcn_layer.2} parent=0
    _
  %s9 = ssub.s32 1, %s7
  %s10 = scalar_select 0, %s9, %s7
  $region1: #{fcn_layer.2} parent=0
    #allocation2 [shape = 'u8[65536]{0}', space=vmem, size = 0x10000, scoped, tag = 'input window, operand 0, single buffered']
    #allocation3 [shape = 's32[1]{0}', space=sflag, size = 0x4, scoped, tag = 'scoped memory for fcn_layer.2']
    %11 = vsyncpa [#allocation3], 0
    // Predicated region
    $region2: #{fcn_layer.2} parent=1 // pred_check
      _
    $region3: #{fcn_layer.2} parent=1 // pred_check_branch
      %13 = sbr.rel (0) target = $region5
    $region4: #{fcn_layer.2} parent=1 // pred_region
      %s15 = ssub.s32 2048, 2048
      %16 = vsyncadd [#allocation3], %s15
      %s17 = sshll.u32 [#allocation2], 4
      %s18 = int_to_ptr.vmem [resolvable:$true] %s17
      %23 = dma.hbm_to_vmem [thread:$0]  %s0, 2048, %s18, [#allocation3], 128, 128, 8
    $region5: #{fcn_layer.2} parent=1 // pred_fallthru
      _
    // Predicated region
    $region6: #{fcn_layer.2} parent=1 // pred_check
      _
    $region7: #{fcn_layer.2} parent=1 // pred_check_branch
      %25 = sbr.rel (0) target = $region9
    $region8: #{fcn_layer.2} parent=1 // pred_region
      _
    $region9: #{fcn_layer.2} parent=1 // pred_fallthru
      _
    // Predicated region
    $region10: #{fcn_layer.2} parent=1 // pred_check
      _
    $region11: #{fcn_layer.2} parent=1 // pred_check_branch
      %27 = sbr.rel (0) target = $region13
    $region12: #{fcn_layer.2} parent=1 // pred_region
      _
    $region13: #{fcn_layer.2} parent=1 // pred_fallthru
      _
    // Predicated region
    $region14: #{fcn_layer.2} parent=1 // pred_check
      _
    $region15: #{fcn_layer.2} parent=1 // pred_check_branch
      %29 = sbr.rel (0) target = $region17
    $region16: #{fcn_layer.2} parent=1 // pred_region
      %30 = dma.done [#allocation3], 2048
    $region17: #{fcn_layer.2} parent=1 // pred_fallthru
      _
    %v31 = vld [vmem:[#allocation2] sm:$0xff]
    %v32 = vld [vmem:[#allocation2 + $0x8] sm:$0xff]
    %v33 = vld [vmem:[#allocation2 + $0x10] sm:$0xff]
    %v34 = vld [vmem:[#allocation2 + $0x18] sm:$0xff]
    %v35 = vld [vmem:[#allocation2 + $0x20] sm:$0xff]
    %v36 = vld [vmem:[#allocation2 + $0x28] sm:$0xff]
    %v37 = vld [vmem:[#allocation2 + $0x30] sm:$0xff]
    %v38 = vld [vmem:[#allocation2 + $0x38] sm:$0xff]
    %v39 = vld [vmem:[#allocation2 + $0x40] sm:$0xff]
    %v40 = vld [vmem:[#allocation2 + $0x48] sm:$0xff]
    %v41 = vld [vmem:[#allocation2 + $0x50] sm:$0xff]
    %v42 = vld [vmem:[#allocation2 + $0x58] sm:$0xff]
    %v43 = vld [vmem:[#allocation2 + $0x60] sm:$0xff]
    %v44 = vld [vmem:[#allocation2 + $0x68] sm:$0xff]
    %v45 = vld [vmem:[#allocation2 + $0x70] sm:$0xff]
    %v46 = vld [vmem:[#allocation2 + $0x78] sm:$0xff]
    %v47 = vld [vmem:[%s1] sm:$0xff]
    %v48 = vld [vmem:[%s1 + $0x8] sm:$0xff]
    %v49 = vld [vmem:[%s2] sm:$0x1]
    %v51 = vlaneseq
    %v52 = vshrl.u32 %v51, 7
    %v53 = vsub.s32 0, %v52
    %v54 = vrot.slane %v49, %v53
    %vm56 = vcmask 130048
    %v58 = vsel %vm56, %v31, 0
    %v61 = vsel %vm56, %v32, 0
    %v64 = vsel %vm56, %v33, 0
    %v67 = vsel %vm56, %v34, 0
    %v70 = vsel %vm56, %v35, 0
    %v73 = vsel %vm56, %v36, 0
    %v76 = vsel %vm56, %v37, 0
    %v79 = vsel %vm56, %v38, 0
    %v82 = vsel %vm56, %v39, 0
    %v85 = vsel %vm56, %v40, 0
    %v88 = vsel %vm56, %v41, 0
    %v91 = vsel %vm56, %v42, 0
    %v94 = vsel %vm56, %v43, 0
    %v97 = vsel %vm56, %v44, 0
    %v100 = vsel %vm56, %v45, 0
    %v103 = vsel %vm56, %v46, 0
    %105 = vmatprep.subr.mxu0 0.0
    %106 = vmatpush1.msra.mxu0 %v47
    %107 = vmatprep.subr.mxu0 0.0
    %108 = vmatpush1.msra.mxu0 %v48
    %109 = vmatprep.subr.mxu0 0.0
    %110 = vmatpush1.msra.mxu0 0.0
    %111 = vmatprep.subr.mxu0 0.0
    %112 = vmatpush1.msra.mxu0 0.0
    %113 = vmatprep.subr.mxu0 0.0
    %114 = vmatpush1.msra.mxu0 0.0
    %115 = vmatprep.subr.mxu0 0.0
    %116 = vmatpush1.msra.mxu0 0.0
    %117 = vmatprep.subr.mxu0 0.0
    %118 = vmatpush1.msra.mxu0 0.0
    %119 = vmatprep.subr.mxu0 0.0
    %120 = vmatpush1.msra.mxu0 0.0
    %121 = vmatprep.subr.mxu0 0.0
    %122 = vmatpush1.msra.mxu0 0.0
    %123 = vmatprep.subr.mxu0 0.0
    %124 = vmatpush1.msra.mxu0 0.0
    %125 = vmatprep.subr.mxu0 0.0
    %126 = vmatpush1.msra.mxu0 0.0
    %127 = vmatprep.subr.mxu0 0.0
    %128 = vmatpush1.msra.mxu0 0.0
    %129 = vmatprep.subr.mxu0 0.0
    %130 = vmatpush1.msra.mxu0 0.0
    %131 = vmatprep.subr.mxu0 0.0
    %132 = vmatpush1.msra.mxu0 0.0
    %133 = vmatprep.subr.mxu0 0.0
    %134 = vmatpush1.msra.mxu0 0.0
    %135 = vmatprep.subr.mxu0 0.0
    %136 = vmatpush1.msra.mxu0 0.0
    %137 = vmatprep.subr.mxu0 0.0
    %138 = vmatpush1.msra.mxu0 0.0
    %139 = vmatprep.subr.mxu0 0.0
    %140 = vmatpush1.msra.mxu0 0.0
    %141 = vmatprep.subr.mxu0 0.0
    %142 = vmatpush1.msra.mxu0 0.0
    %143 = vmatprep.subr.mxu0 0.0
    %144 = vmatpush1.msra.mxu0 0.0
    %145 = vmatprep.subr.mxu0 0.0
    %146 = vmatpush1.msra.mxu0 0.0
    %147 = vmatprep.subr.mxu0 0.0
    %148 = vmatpush1.msra.mxu0 0.0
    %149 = vmatprep.subr.mxu0 0.0
    %150 = vmatpush1.msra.mxu0 0.0
    %151 = vmatprep.subr.mxu0 0.0
    %152 = vmatpush1.msra.mxu0 0.0
    %153 = vmatprep.subr.mxu0 0.0
    %154 = vmatpush1.msra.mxu0 0.0
    %155 = vmatprep.subr.mxu0 0.0
    %156 = vmatpush1.msra.mxu0 0.0
    %157 = vmatprep.subr.mxu0 0.0
    %158 = vmatpush1.msra.mxu0 0.0
    %159 = vmatprep.subr.mxu0 0.0
    %160 = vmatpush1.msra.mxu0 0.0
    %161 = vmatprep.subr.mxu0 0.0
    %162 = vmatpush1.msra.mxu0 0.0
    %163 = vmatprep.subr.mxu0 0.0
    %164 = vmatpush1.msra.mxu0 0.0
    %165 = vmatprep.subr.mxu0 0.0
    %166 = vmatpush1.msra.mxu0 0.0
    %167 = vmatprep.subr.mxu0 0.0
    %168 = vmatpush1.msra.mxu0 0.0
    %169 = vmatprep.mubr.f32.mxu0 0.0
    %170 = vmatmul.mubr.f32.gmra.mrb[0].mxu0 %v58
    %v171 = vpop.f32.mrb[0].mxu0
    %v172 = vadd.f32 %v54, %v171
    %v173 = vpop.f32.mrb[0].mxu0
    %174 = vmatprep.mubr.f32.mxu0 0.0
    %175 = vmatmul.mubr.f32.gmra.mrb[0].mxu0 %v61
    %v176 = vpop.f32.mrb[0].mxu0
    %v177 = vadd.f32 %v54, %v176
    %v178 = vpop.f32.mrb[0].mxu0
    %179 = vmatprep.mubr.f32.mxu0 0.0
    %180 = vmatmul.mubr.f32.gmra.mrb[0].mxu0 %v64
    %v181 = vpop.f32.mrb[0].mxu0
    %v182 = vadd.f32 %v54, %v181
    %v183 = vpop.f32.mrb[0].mxu0
    %184 = vmatprep.mubr.f32.mxu0 0.0
    %185 = vmatmul.mubr.f32.gmra.mrb[0].mxu0 %v67
    %v186 = vpop.f32.mrb[0].mxu0
    %v187 = vadd.f32 %v54, %v186
    %v188 = vpop.f32.mrb[0].mxu0
    %189 = vmatprep.mubr.f32.mxu0 0.0
    %190 = vmatmul.mubr.f32.gmra.mrb[0].mxu0 %v70
    %v191 = vpop.f32.mrb[0].mxu0
    %v192 = vadd.f32 %v54, %v191
    %v193 = vpop.f32.mrb[0].mxu0
    %194 = vmatprep.mubr.f32.mxu0 0.0
    %195 = vmatmul.mubr.f32.gmra.mrb[0].mxu0 %v73
    %v196 = vpop.f32.mrb[0].mxu0
    %v197 = vadd.f32 %v54, %v196
    %v198 = vpop.f32.mrb[0].mxu0
    %199 = vmatprep.mubr.f32.mxu0 0.0
    %200 = vmatmul.mubr.f32.gmra.mrb[0].mxu0 %v76
    %v201 = vpop.f32.mrb[0].mxu0
    %v202 = vadd.f32 %v54, %v201
    %v203 = vpop.f32.mrb[0].mxu0
    %204 = vmatprep.mubr.f32.mxu0 0.0
    %205 = vmatmul.mubr.f32.gmra.mrb[0].mxu0 %v79
    %v206 = vpop.f32.mrb[0].mxu0
    %v207 = vadd.f32 %v54, %v206
    %v208 = vpop.f32.mrb[0].mxu0
    %209 = vmatprep.mubr.f32.mxu0 0.0
    %210 = vmatmul.mubr.f32.gmra.mrb[0].mxu0 %v82
    %v211 = vpop.f32.mrb[0].mxu0
    %v212 = vadd.f32 %v54, %v211
    %v213 = vpop.f32.mrb[0].mxu0
    %214 = vmatprep.mubr.f32.mxu0 0.0
    %215 = vmatmul.mubr.f32.gmra.mrb[0].mxu0 %v85
    %v216 = vpop.f32.mrb[0].mxu0
    %v217 = vadd.f32 %v54, %v216
    %v218 = vpop.f32.mrb[0].mxu0
    %219 = vmatprep.mubr.f32.mxu0 0.0
    %220 = vmatmul.mubr.f32.gmra.mrb[0].mxu0 %v88
    %v221 = vpop.f32.mrb[0].mxu0
    %v222 = vadd.f32 %v54, %v221
    %v223 = vpop.f32.mrb[0].mxu0
    %224 = vmatprep.mubr.f32.mxu0 0.0
    %225 = vmatmul.mubr.f32.gmra.mrb[0].mxu0 %v91
    %v226 = vpop.f32.mrb[0].mxu0
    %v227 = vadd.f32 %v54, %v226
    %v228 = vpop.f32.mrb[0].mxu0
    %229 = vmatprep.mubr.f32.mxu0 0.0
    %230 = vmatmul.mubr.f32.gmra.mrb[0].mxu0 %v94
    %v231 = vpop.f32.mrb[0].mxu0
    %v232 = vadd.f32 %v54, %v231
    %v233 = vpop.f32.mrb[0].mxu0
    %234 = vmatprep.mubr.f32.mxu0 0.0
    %235 = vmatmul.mubr.f32.gmra.mrb[0].mxu0 %v97
    %v236 = vpop.f32.mrb[0].mxu0
    %v237 = vadd.f32 %v54, %v236
    %v238 = vpop.f32.mrb[0].mxu0
    %239 = vmatprep.mubr.f32.mxu0 0.0
    %240 = vmatmul.mubr.f32.gmra.mrb[0].mxu0 %v100
    %v241 = vpop.f32.mrb[0].mxu0
    %v242 = vadd.f32 %v54, %v241
    %v243 = vpop.f32.mrb[0].mxu0
    %244 = vmatprep.mubr.f32.mxu0 0.0
    %245 = vmatmul.mubr.f32.gmra.mrb[0].mxu0 %v103
    %v246 = vpop.f32.mrb[0].mxu0
    %v247 = vadd.f32 %v54, %v246
    %v248 = vpop.f32.mrb[0].mxu0
    %249 = vdwg.mxu0
    %v250 = vmax.f32 %v172, 0.0
    %v251 = vmax.f32 %v177, 0.0
    %v252 = vmax.f32 %v182, 0.0
    %v253 = vmax.f32 %v187, 0.0
    %v254 = vmax.f32 %v192, 0.0
    %v255 = vmax.f32 %v197, 0.0
    %v256 = vmax.f32 %v202, 0.0
    %v257 = vmax.f32 %v207, 0.0
    %v258 = vmax.f32 %v212, 0.0
    %v259 = vmax.f32 %v217, 0.0
    %v260 = vmax.f32 %v222, 0.0
    %v261 = vmax.f32 %v227, 0.0
    %v262 = vmax.f32 %v232, 0.0
    %v263 = vmax.f32 %v237, 0.0
    %v264 = vmax.f32 %v242, 0.0
    %v265 = vmax.f32 %v247, 0.0
    %vm266 = vcmask 31744
    %267 = vst.msk [vmem:[%s3] sm:$0xff] %vm266, %v250
    %268 = vst.msk [vmem:[%s3 + $0x8] sm:$0xff] %vm266, %v251
    %269 = vst.msk [vmem:[%s3 + $0x10] sm:$0xff] %vm266, %v252
    %270 = vst.msk [vmem:[%s3 + $0x18] sm:$0xff] %vm266, %v253
    %271 = vst.msk [vmem:[%s3 + $0x20] sm:$0xff] %vm266, %v254
    %272 = vst.msk [vmem:[%s3 + $0x28] sm:$0xff] %vm266, %v255
    %273 = vst.msk [vmem:[%s3 + $0x30] sm:$0xff] %vm266, %v256
    %274 = vst.msk [vmem:[%s3 + $0x38] sm:$0xff] %vm266, %v257
    %275 = vst.msk [vmem:[%s3 + $0x40] sm:$0xff] %vm266, %v258
    %276 = vst.msk [vmem:[%s3 + $0x48] sm:$0xff] %vm266, %v259
    %277 = vst.msk [vmem:[%s3 + $0x50] sm:$0xff] %vm266, %v260
    %278 = vst.msk [vmem:[%s3 + $0x58] sm:$0xff] %vm266, %v261
    %279 = vst.msk [vmem:[%s3 + $0x60] sm:$0xff] %vm266, %v262
    %280 = vst.msk [vmem:[%s3 + $0x68] sm:$0xff] %vm266, %v263
    %281 = vst.msk [vmem:[%s3 + $0x70] sm:$0xff] %vm266, %v264
    %282 = vst.msk [vmem:[%s3 + $0x78] sm:$0xff] %vm266, %v265
    %v283 = vsel %vm266, %v250, 0.0
    %284 = vadd.xlane.f32.xlu0 %v283
    %v285 = vpop.xlane.xlu0 %284
    %v286 = vsel %vm266, %v251, 0.0
    %287 = vadd.xlane.f32.xlu0 %v286
    %v288 = vpop.xlane.xlu0 %287
    %v289 = vsel %vm266, %v252, 0.0
    %290 = vadd.xlane.f32.xlu0 %v289
    %v291 = vpop.xlane.xlu0 %290
    %v292 = vsel %vm266, %v253, 0.0
    %293 = vadd.xlane.f32.xlu0 %v292
    %v294 = vpop.xlane.xlu0 %293
    %v295 = vsel %vm266, %v254, 0.0
    %296 = vadd.xlane.f32.xlu0 %v295
    %v297 = vpop.xlane.xlu0 %296
    %v298 = vsel %vm266, %v255, 0.0
    %299 = vadd.xlane.f32.xlu0 %v298
    %v300 = vpop.xlane.xlu0 %299
    %v301 = vsel %vm266, %v256, 0.0
    %302 = vadd.xlane.f32.xlu0 %v301
    %v303 = vpop.xlane.xlu0 %302
    %v304 = vsel %vm266, %v257, 0.0
    %305 = vadd.xlane.f32.xlu0 %v304
    %v306 = vpop.xlane.xlu0 %305
    %v307 = vsel %vm266, %v258, 0.0
    %308 = vadd.xlane.f32.xlu0 %v307
    %v309 = vpop.xlane.xlu0 %308
    %v310 = vsel %vm266, %v259, 0.0
    %311 = vadd.xlane.f32.xlu0 %v310
    %v312 = vpop.xlane.xlu0 %311
    %v313 = vsel %vm266, %v260, 0.0
    %314 = vadd.xlane.f32.xlu0 %v313
    %v315 = vpop.xlane.xlu0 %314
    %v316 = vsel %vm266, %v261, 0.0
    %317 = vadd.xlane.f32.xlu0 %v316
    %v318 = vpop.xlane.xlu0 %317
    %v319 = vsel %vm266, %v262, 0.0
    %320 = vadd.xlane.f32.xlu0 %v319
    %v321 = vpop.xlane.xlu0 %320
    %v322 = vsel %vm266, %v263, 0.0
    %323 = vadd.xlane.f32.xlu0 %v322
    %v324 = vpop.xlane.xlu0 %323
    %v325 = vsel %vm266, %v264, 0.0
    %326 = vadd.xlane.f32.xlu0 %v325
    %v327 = vpop.xlane.xlu0 %326
    %v328 = vsel %vm266, %v265, 0.0
    %329 = vadd.xlane.f32.xlu0 %v328
    %v330 = vpop.xlane.xlu0 %329
    %vm331 = vcmask 7168
    %332 = vst.msk [vmem:[%s4] sm:$0xff] %vm331, %v285
    %333 = vst.msk [vmem:[%s4 + $0x8] sm:$0xff] %vm331, %v288
    %334 = vst.msk [vmem:[%s4 + $0x10] sm:$0xff] %vm331, %v291
    %335 = vst.msk [vmem:[%s4 + $0x18] sm:$0xff] %vm331, %v294
    %336 = vst.msk [vmem:[%s4 + $0x20] sm:$0xff] %vm331, %v297
    %337 = vst.msk [vmem:[%s4 + $0x28] sm:$0xff] %vm331, %v300
    %338 = vst.msk [vmem:[%s4 + $0x30] sm:$0xff] %vm331, %v303
    %339 = vst.msk [vmem:[%s4 + $0x38] sm:$0xff] %vm331, %v306
    %340 = vst.msk [vmem:[%s4 + $0x40] sm:$0xff] %vm331, %v309
    %341 = vst.msk [vmem:[%s4 + $0x48] sm:$0xff] %vm331, %v312
    %342 = vst.msk [vmem:[%s4 + $0x50] sm:$0xff] %vm331, %v315
    %343 = vst.msk [vmem:[%s4 + $0x58] sm:$0xff] %vm331, %v318
    %344 = vst.msk [vmem:[%s4 + $0x60] sm:$0xff] %vm331, %v321
    %345 = vst.msk [vmem:[%s4 + $0x68] sm:$0xff] %vm331, %v324
    %346 = vst.msk [vmem:[%s4 + $0x70] sm:$0xff] %vm331, %v327
    %347 = vst.msk [vmem:[%s4 + $0x78] sm:$0xff] %vm331, %v330
    %v348 = vmul.f32 %v250, %v250
    %v349 = vmul.f32 %v251, %v251
    %v350 = vmul.f32 %v252, %v252
    %v351 = vmul.f32 %v253, %v253
    %v352 = vmul.f32 %v254, %v254
    %v353 = vmul.f32 %v255, %v255
    %v354 = vmul.f32 %v256, %v256
    %v355 = vmul.f32 %v257, %v257
    %v356 = vmul.f32 %v258, %v258
    %v357 = vmul.f32 %v259, %v259
    %v358 = vmul.f32 %v260, %v260
    %v359 = vmul.f32 %v261, %v261
    %v360 = vmul.f32 %v262, %v262
    %v361 = vmul.f32 %v263, %v263
    %v362 = vmul.f32 %v264, %v264
    %v363 = vmul.f32 %v265, %v265
    %v364 = vsel %vm266, %v348, 0.0
    %365 = vadd.xlane.f32.xlu0 %v364
    %v366 = vpop.xlane.xlu0 %365
    %v367 = vsel %vm266, %v349, 0.0
    %368 = vadd.xlane.f32.xlu0 %v367
    %v369 = vpop.xlane.xlu0 %368
    %v370 = vsel %vm266, %v350, 0.0
    %371 = vadd.xlane.f32.xlu0 %v370
    %v372 = vpop.xlane.xlu0 %371
    %v373 = vsel %vm266, %v351, 0.0
    %374 = vadd.xlane.f32.xlu0 %v373
    %v375 = vpop.xlane.xlu0 %374
    %v376 = vsel %vm266, %v352, 0.0
    %377 = vadd.xlane.f32.xlu0 %v376
    %v378 = vpop.xlane.xlu0 %377
    %v379 = vsel %vm266, %v353, 0.0
    %380 = vadd.xlane.f32.xlu0 %v379
    %v381 = vpop.xlane.xlu0 %380
    %v382 = vsel %vm266, %v354, 0.0
    %383 = vadd.xlane.f32.xlu0 %v382
    %v384 = vpop.xlane.xlu0 %383
    %v385 = vsel %vm266, %v355, 0.0
    %386 = vadd.xlane.f32.xlu0 %v385
    %v387 = vpop.xlane.xlu0 %386
    %v388 = vsel %vm266, %v356, 0.0
    %389 = vadd.xlane.f32.xlu0 %v388
    %v390 = vpop.xlane.xlu0 %389
    %v391 = vsel %vm266, %v357, 0.0
    %392 = vadd.xlane.f32.xlu0 %v391
    %v393 = vpop.xlane.xlu0 %392
    %v394 = vsel %vm266, %v358, 0.0
    %395 = vadd.xlane.f32.xlu0 %v394
    %v396 = vpop.xlane.xlu0 %395
    %v397 = vsel %vm266, %v359, 0.0
    %398 = vadd.xlane.f32.xlu0 %v397
    %v399 = vpop.xlane.xlu0 %398
    %v400 = vsel %vm266, %v360, 0.0
    %401 = vadd.xlane.f32.xlu0 %v400
    %v402 = vpop.xlane.xlu0 %401
    %v403 = vsel %vm266, %v361, 0.0
    %404 = vadd.xlane.f32.xlu0 %v403
    %v405 = vpop.xlane.xlu0 %404
    %v406 = vsel %vm266, %v362, 0.0
    %407 = vadd.xlane.f32.xlu0 %v406
    %v408 = vpop.xlane.xlu0 %407
    %v409 = vsel %vm266, %v363, 0.0
    %410 = vadd.xlane.f32.xlu0 %v409
    %v411 = vpop.xlane.xlu0 %410
    %412 = vst.msk [vmem:[%s5] sm:$0xff] %vm331, %v366
    %413 = vst.msk [vmem:[%s5 + $0x8] sm:$0xff] %vm331, %v369
    %414 = vst.msk [vmem:[%s5 + $0x10] sm:$0xff] %vm331, %v372
    %415 = vst.msk [vmem:[%s5 + $0x18] sm:$0xff] %vm331, %v375
    %416 = vst.msk [vmem:[%s5 + $0x20] sm:$0xff] %vm331, %v378
    %417 = vst.msk [vmem:[%s5 + $0x28] sm:$0xff] %vm331, %v381
    %418 = vst.msk [vmem:[%s5 + $0x30] sm:$0xff] %vm331, %v384
    %419 = vst.msk [vmem:[%s5 + $0x38] sm:$0xff] %vm331, %v387
    %420 = vst.msk [vmem:[%s5 + $0x40] sm:$0xff] %vm331, %v390
    %421 = vst.msk [vmem:[%s5 + $0x48] sm:$0xff] %vm331, %v393
    %422 = vst.msk [vmem:[%s5 + $0x50] sm:$0xff] %vm331, %v396
    %423 = vst.msk [vmem:[%s5 + $0x58] sm:$0xff] %vm331, %v399
    %424 = vst.msk [vmem:[%s5 + $0x60] sm:$0xff] %vm331, %v402
    %425 = vst.msk [vmem:[%s5 + $0x68] sm:$0xff] %vm331, %v405
    %426 = vst.msk [vmem:[%s5 + $0x70] sm:$0xff] %vm331, %v408
    %427 = vst.msk [vmem:[%s5 + $0x78] sm:$0xff] %vm331, %v411
    // Predicated region
    $region18: #{fcn_layer.2} parent=1 // pred_check
      _
    $region19: #{fcn_layer.2} parent=1 // pred_check_branch
      %429 = sbr.rel (0) target = $region21
    $region20: #{fcn_layer.2} parent=1 // pred_region
      _
    $region21: #{fcn_layer.2} parent=1 // pred_fallthru
      _
    // Predicated region
    $region22: #{fcn_layer.2} parent=1 // pred_check
      _
    $region23: #{fcn_layer.2} parent=1 // pred_check_branch
      %431 = sbr.rel (0) target = $region25
    $region24: #{fcn_layer.2} parent=1 // pred_region
      _
    $region25: #{fcn_layer.2} parent=1 // pred_fallthru
      _
    // Predicated region
    $region26: #{fcn_layer.2} parent=1 // pred_check
      _
    $region27: #{fcn_layer.2} parent=1 // pred_check_branch
      %433 = sbr.rel (0) target = $region29
    $region28: #{fcn_layer.2} parent=1 // pred_region
      _
    $region29: #{fcn_layer.2} parent=1 // pred_fallthru
      _
    // Predicated region
    $region30: #{fcn_layer.2} parent=1 // pred_check
      _
    $region31: #{fcn_layer.2} parent=1 // pred_check_branch
      %435 = sbr.rel (0) target = $region33
    $region32: #{fcn_layer.2} parent=1 // pred_region
      _
    $region33: #{fcn_layer.2} parent=1 // pred_fallthru
      _
    // Predicated region
    $region34: #{fcn_layer.2} parent=1 // pred_check
      _
    $region35: #{fcn_layer.2} parent=1 // pred_check_branch
      %437 = sbr.rel (0) target = $region37
    $region36: #{fcn_layer.2} parent=1 // pred_region
      _
    $region37: #{fcn_layer.2} parent=1 // pred_fallthru
      _
    // Predicated region
    $region38: #{fcn_layer.2} parent=1 // pred_check
      _
    $region39: #{fcn_layer.2} parent=1 // pred_check_branch
      %439 = sbr.rel (0) target = $region41
    $region40: #{fcn_layer.2} parent=1 // pred_region
      _
    $region41: #{fcn_layer.2} parent=1 // pred_fallthru
      _
    %440 = vsyncpa [#allocation3], 1

// kernel: fcn_layer.3
$region0: #{fcn_layer.3}
  #allocation0 [shape = 'u32[]', space=smem, size = 0x4, offset = 0x4, fixed_abs, tag = 'smem constant byte address 0x4 - core index']
  #allocation1 [shape = 'u32[144,128]{1,0:T(1,128)}', space=vmem, size = 0x12000, scoped, tag = 'internal scratch']
  %s0 = inlined_call_operand.vmem [shape: f32[8,64], index: 0, kind: input, shape index: {}]
  %s1 = inlined_call_operand.vmem [shape: f32[8,1], index: 1, kind: input, shape index: {}]
  %s2 = inlined_call_operand.vmem [shape: f32[8,1], index: 2, kind: input, shape index: {}]
  %s3 = inlined_call_operand.vmem [shape: f32[8,64], index: 3, kind: output, shape index: {}]
  %s4 = sld [smem:[#allocation0]]
  $region22: #{fcn_layer.3} parent=0
    _
  %s6 = ssub.s32 1, %s4
  %s7 = scalar_select 0, %s6, %s4
  // Predicated region
  $region2: #{fcn_layer.3} parent=0 // pred_check
    _
  $region3: #{fcn_layer.3} parent=0 // pred_check_branch
    %9 = sbr.rel (0) target = $region5
  $region4: #{fcn_layer.3} parent=0 // pred_region
    _
  $region5: #{fcn_layer.3} parent=0 // pred_fallthru
    _
  // Predicated region
  $region6: #{fcn_layer.3} parent=0 // pred_check
    _
  $region7: #{fcn_layer.3} parent=0 // pred_check_branch
    %11 = sbr.rel (0) target = $region9
  $region8: #{fcn_layer.3} parent=0 // pred_region
    _
  $region9: #{fcn_layer.3} parent=0 // pred_fallthru
    _
  // Predicated region
  $region10: #{fcn_layer.3} parent=0 // pred_check
    _
  $region11: #{fcn_layer.3} parent=0 // pred_check_branch
    %13 = sbr.rel (0) target = $region13
  $region12: #{fcn_layer.3} parent=0 // pred_region
    _
  $region13: #{fcn_layer.3} parent=0 // pred_fallthru
    _
  %v14 = vld [vmem:[%s0] sm:$0xff]
  %v15 = vld [vmem:[%s1] sm:$0xff]
  %17 = vset.pattern.permute.xlu0 0
  %18 = vperm.xlu0 %17, %v15
  %v19 = vpop.permute.xlu0 %18
  %v21 = vmul.f32 %v14, %v19
  %v22 = vld [vmem:[%s2] sm:$0xff]
  %24 = vset.pattern.permute.xlu0 0
  %25 = vperm.xlu0 %24, %v22
  %v26 = vpop.permute.xlu0 %25
  %v28 = vadd.f32 %v21, %v26
  %vm29 = vcmask 523264
  %30 = vst.msk [vmem:[%s3] sm:$0xff] %vm29, %v28
  // Predicated region
  $region14: #{fcn_layer.3} parent=0 // pred_check
    _
  $region15: #{fcn_layer.3} parent=0 // pred_check_branch
    %32 = sbr.rel (0) target = $region17
  $region16: #{fcn_layer.3} parent=0 // pred_region
    _
  $region17: #{fcn_layer.3} parent=0 // pred_fallthru
    _
  // Predicated region
  $region18: #{fcn_layer.3} parent=0 // pred_check
    _
  $region19: #{fcn_layer.3} parent=0 // pred_check_branch
    %34 = sbr.rel (0) target = $region21
  $region20: #{fcn_layer.3} parent=0 // pred_region
    _
  $region21: #{fcn_layer.3} parent=0 // pred_fallthru
    _

</llo_original>
